<compile_context>
chip_gen: v7x
topology: tpu7x:2x2x1
jax: 0.10.0
libtpu: 0.0.40
codegen_flags: <defaults>
</compile_context>

<pallas_src>
import functools

import jax
import jax.numpy as jnp
from jax.experimental import pallas as pl
from jax.experimental.pallas import tpu as pltpu


def _ffn_kernel(x_ref, w1_ref, b1_ref, w2_ref, b2_ref, o_ref, acc_ref):
    # x_ref:   (tm, d_model)      token tile (invariant across k)
    # w1_ref:  (d_model, tk_ff)   W1 columns for this d_ff chunk
    # b1_ref:  (1, tk_ff)
    # w2_ref:  (tk_ff, d_model)   W2 rows for this d_ff chunk
    # b2_ref:  (1, d_model)
    # o_ref:   (tm, d_model)      output tile (written at last k)
    # acc_ref: (tm, d_model) f32  scratch accumulator over the d_ff chunks
    k = pl.program_id(1)

    @pl.when(k == 0)
    def _():
        acc_ref[...] = jnp.zeros_like(acc_ref)

    x = x_ref[...]
    # First linear (this d_ff chunk) + bias + ReLU; f32 accumulation on the MXU.
    h = jnp.dot(x, w1_ref[...], preferred_element_type=jnp.float32)
    h = h + b1_ref[...].astype(jnp.float32)
    h = jnp.maximum(h, 0.0)
    # (dropout == identity at inference)
    # Second linear: cast ReLU output to the weight dtype (bf16 in production)
    # so the MXU runs at narrow-dtype peak; accumulate the partial product in f32.
    acc_ref[...] += jnp.dot(h.astype(w2_ref.dtype), w2_ref[...],
                            preferred_element_type=jnp.float32)

    @pl.when(k == pl.num_programs(1) - 1)
    def _():
        o_ref[...] = (acc_ref[...]
                      + b2_ref[...].astype(jnp.float32)).astype(o_ref.dtype)


def _round_up(v, m):
    return (v + m - 1) // m * m


@functools.partial(jax.jit, static_argnames=("tm", "tk_ff"))
def positionwise_ffn(x, w1, b1, w2, b2, *, tm=256, tk_ff=512):
    """x: (B, S, d_model) -> (B, S, d_model).  w2(relu(w1(x)+b1))+b2 (eval-mode FFN)."""
    B, S, d_model = x.shape
    d_ff = w1.shape[1]
    M = B * S
    x2d = x.reshape(M, d_model)

    # Token tile: large enough to fill the MXU (256 rows by default), clamped to
    # the problem size (kept a multiple of 8 sublanes) so tiny shapes still work.
    tm = max(8, min(tm, _round_up(M, 8)))
    # The d_ff chunk must tile d_ff exactly — OOB padding would corrupt the
    # reduction.  Fall back to a single chunk if tk_ff does not divide d_ff.
    if d_ff % tk_ff != 0:
        tk_ff = d_ff

    grid = (pl.cdiv(M, tm), d_ff // tk_ff)

    act_bytes = jnp.dtype(x.dtype).itemsize
    w_bytes = jnp.dtype(w1.dtype).itemsize
    cost = pl.CostEstimate(
        flops=4 * M * d_model * d_ff,  # two (M,d_model,d_ff) matmuls
        transcendentals=0,
        bytes_accessed=(2 * M * d_model * act_bytes
                        + (w1.size + w2.size + b1.size + b2.size) * w_bytes),
    )

    out2d = pl.pallas_call(
        _ffn_kernel,
        out_shape=jax.ShapeDtypeStruct((M, d_model), x.dtype),
        grid_spec=pltpu.PrefetchScalarGridSpec(
            num_scalar_prefetch=0,
            grid=grid,
            in_specs=[
                pl.BlockSpec((tm, d_model), lambda i, k: (i, 0)),      # x tile
                pl.BlockSpec((d_model, tk_ff), lambda i, k: (0, k)),   # W1 chunk
                pl.BlockSpec((1, tk_ff), lambda i, k: (0, k)),         # b1 chunk
                pl.BlockSpec((tk_ff, d_model), lambda i, k: (k, 0)),   # W2 chunk
                pl.BlockSpec((1, d_model), lambda i, k: (0, 0)),       # b2
            ],
            out_specs=pl.BlockSpec((tm, d_model), lambda i, k: (i, 0)),
            scratch_shapes=[pltpu.VMEM((tm, d_model), jnp.float32)],
        ),
        compiler_params=pltpu.CompilerParams(
            dimension_semantics=("parallel", "arbitrary"),
            vmem_limit_bytes=48 << 20,
        ),
        cost_estimate=cost,
    )(x2d, w1, b1, w2, b2)

    return out2d.reshape(B, S, d_model)


def init_params(key, d_model, d_ff, dtype=jnp.float32):
    """Deterministic init mimicking PyTorch nn.Linear defaults (U(-1/sqrt(fan_in), +))."""
    k1, k2, k3, k4 = jax.random.split(key, 4)
    bound1 = 1.0 / (d_model ** 0.5)
    bound2 = 1.0 / (d_ff ** 0.5)
    # Stored pre-transposed relative to torch's (out, in) layout.
    w1 = jax.random.uniform(k1, (d_model, d_ff), dtype, -bound1, bound1)
    b1 = jax.random.uniform(k2, (1, d_ff), dtype, -bound1, bound1)
    w2 = jax.random.uniform(k3, (d_ff, d_model), dtype, -bound2, bound2)
    b2 = jax.random.uniform(k4, (1, d_model), dtype, -bound2, bound2)
    return w1, b1, w2, b2


if __name__ == "__main__":
    key = jax.random.PRNGKey(0)
    B, S, d_model, d_ff = 2, 8, 32, 64

    kx, kp = jax.random.split(key)
    x = jax.random.normal(kx, (B, S, d_model), jnp.float32)
    w1, b1, w2, b2 = init_params(kp, d_model, d_ff)

    out = positionwise_ffn(x, w1, b1, w2, b2)
    out = jax.block_until_ready(out)

    # Pure-JAX reference check (dropout is identity at inference).
    ref = jnp.maximum(x @ w1 + b1[0], 0.0) @ w2 + b2[0]
    assert out.shape == x.shape
    assert jnp.allclose(out, ref, atol=1e-5, rtol=1e-5), "mismatch vs reference"

    print("KERNEL_OK")
</pallas_src>

<mosaic_0001>
module attributes {stable_mosaic.version = 11 : i64} {
  func.func @_ffn_kernel(%arg0: i32, %arg1: i32, %arg2: memref<16x32xf32, #tpu.memory_space<vmem>>, %arg3: memref<32x64xf32, #tpu.memory_space<vmem>>, %arg4: memref<1x64xf32, #tpu.memory_space<vmem>>, %arg5: memref<64x32xf32, #tpu.memory_space<vmem>>, %arg6: memref<1x32xf32, #tpu.memory_space<vmem>>, %arg7: memref<16x32xf32, #tpu.memory_space<vmem>>, %arg8: memref<16x32xf32, #tpu.memory_space<vmem>>) attributes {dimension_semantics = [#tpu.dimension_semantics<parallel>, #tpu.dimension_semantics<arbitrary>], iteration_bounds = array<i64: 1, 1>, scalar_prefetch = 0 : i64, scratch_operands = 1 : i64, tpu.core_type = #tpu.core_type<tc>, window_params = [{transform_indices = @transform_0, window_bounds = array<i64: 16, 32>}, {transform_indices = @transform_1, window_bounds = array<i64: 32, 64>}, {transform_indices = @transform_2, window_bounds = array<i64: 1, 64>}, {transform_indices = @transform_3, window_bounds = array<i64: 64, 32>}, {pipeline_mode = #tpu.pipeline_mode<synchronous>, transform_indices = @transform_4, window_bounds = array<i64: 1, 32>}, {transform_indices = @transform_5, window_bounds = array<i64: 16, 32>}]} {
    %c0_i32 = arith.constant 0 : i32
    %0 = arith.cmpi eq, %arg1, %c0_i32 : i32
    %1 = arith.extui %0 : i1 to i32
    %c0_i32_0 = arith.constant 0 : i32
    %2 = arith.cmpi ne, %1, %c0_i32_0 : i32
    scf.if %2 {
      %cst_16 = arith.constant 0.000000e+00 : f32
      %19 = vector.broadcast %cst_16 : f32 to vector<16x32xf32>
      %c0_17 = arith.constant 0 : index
      %c0_18 = arith.constant 0 : index
      %20 = vector.load %arg8[%c0_17, %c0_18] : memref<16x32xf32, #tpu.memory_space<vmem>>, vector<16x32xf32>
      tpu.vector_store %arg8[%c0_17, %c0_18], %19 {strides = array<i32>} : memref<16x32xf32, #tpu.memory_space<vmem>>, vector<16x32xf32>,
    } else {
    }
    %c0 = arith.constant 0 : index
    %c0_1 = arith.constant 0 : index
    %3 = vector.load %arg2[%c0, %c0_1] : memref<16x32xf32, #tpu.memory_space<vmem>>, vector<16x32xf32>
    %c0_2 = arith.constant 0 : index
    %c0_3 = arith.constant 0 : index
    %4 = vector.load %arg3[%c0_2, %c0_3] : memref<32x64xf32, #tpu.memory_space<vmem>>, vector<32x64xf32>
    %cst = arith.constant dense<0.000000e+00> : vector<16x64xf32>
    %5 = tpu.matmul %3, %4, %cst {dimension_numbers = #tpu.dot_dimension_numbers<[1], [0], [0], [1], [0, 0, 1, 1], [], []>} : vector<16x32xf32>, vector<32x64xf32>, vector<16x64xf32> -> vector<16x64xf32>
    %c0_4 = arith.constant 0 : index
    %c0_5 = arith.constant 0 : index
    %6 = vector.load %arg4[%c0_4, %c0_5] : memref<1x64xf32, #tpu.memory_space<vmem>>, vector<1x64xf32>
    %7 = vector.broadcast %6 : vector<1x64xf32> to vector<16x64xf32>
    %8 = arith.addf %5, %7 : vector<16x64xf32>
    %cst_6 = arith.constant 0.000000e+00 : f32
    %9 = vector.broadcast %cst_6 : f32 to vector<16x64xf32>
    %10 = arith.maximumf %8, %9 : vector<16x64xf32>
    %c0_7 = arith.constant 0 : index
    %c0_8 = arith.constant 0 : index
    %11 = vector.load %arg8[%c0_7, %c0_8] : memref<16x32xf32, #tpu.memory_space<vmem>>, vector<16x32xf32>
    %c0_9 = arith.constant 0 : index
    %c0_10 = arith.constant 0 : index
    %12 = vector.load %arg5[%c0_9, %c0_10] : memref<64x32xf32, #tpu.memory_space<vmem>>, vector<64x32xf32>
    %cst_11 = arith.constant dense<0.000000e+00> : vector<16x32xf32>
    %13 = tpu.matmul %10, %12, %cst_11 {dimension_numbers = #tpu.dot_dimension_numbers<[1], [0], [0], [1], [0, 0, 1, 1], [], []>} : vector<16x64xf32>, vector<64x32xf32>, vector<16x32xf32> -> vector<16x32xf32>
    %14 = arith.addf %11, %13 : vector<16x32xf32>
    %c0_12 = arith.constant 0 : index
    %c0_13 = arith.constant 0 : index
    %15 = vector.load %arg8[%c0_12, %c0_13] : memref<16x32xf32, #tpu.memory_space<vmem>>, vector<16x32xf32>
    tpu.vector_store %arg8[%c0_12, %c0_13], %14 {strides = array<i32>} : memref<16x32xf32, #tpu.memory_space<vmem>>, vector<16x32xf32>,
    %c0_i32_14 = arith.constant 0 : i32
    %16 = arith.cmpi eq, %arg1, %c0_i32_14 : i32
    %17 = arith.extui %16 : i1 to i32
    %c0_i32_15 = arith.constant 0 : i32
    %18 = arith.cmpi ne, %17, %c0_i32_15 : i32
    scf.if %18 {
      %c0_16 = arith.constant 0 : index
      %c0_17 = arith.constant 0 : index
      %19 = vector.load %arg8[%c0_16, %c0_17] : memref<16x32xf32, #tpu.memory_space<vmem>>, vector<16x32xf32>
      %c0_18 = arith.constant 0 : index
      %c0_19 = arith.constant 0 : index
      %20 = vector.load %arg6[%c0_18, %c0_19] : memref<1x32xf32, #tpu.memory_space<vmem>>, vector<1x32xf32>
      %21 = vector.broadcast %20 : vector<1x32xf32> to vector<16x32xf32>
      %22 = arith.addf %19, %21 : vector<16x32xf32>
      %c0_20 = arith.constant 0 : index
      %c0_21 = arith.constant 0 : index
      %23 = vector.load %arg7[%c0_20, %c0_21] : memref<16x32xf32, #tpu.memory_space<vmem>>, vector<16x32xf32>
      tpu.vector_store %arg7[%c0_20, %c0_21], %22 {strides = array<i32>} : memref<16x32xf32, #tpu.memory_space<vmem>>, vector<16x32xf32>,
    } else {
    }
    return
  }
  func.func @transform_0(%arg0: i32, %arg1: i32) -> (i32, i32) {
    %c0_i32 = arith.constant 0 : i32
    %c0_i32_0 = arith.constant 0 : i32
    return %arg0, %c0_i32 : i32, i32
  }
  func.func @transform_1(%arg0: i32, %arg1: i32) -> (i32, i32) {
    %c0_i32 = arith.constant 0 : i32
    %c0_i32_0 = arith.constant 0 : i32
    return %c0_i32, %arg1 : i32, i32
  }
  func.func @transform_2(%arg0: i32, %arg1: i32) -> (i32, i32) {
    %c0_i32 = arith.constant 0 : i32
    %c0_i32_0 = arith.constant 0 : i32
    return %c0_i32, %arg1 : i32, i32
  }
  func.func @transform_3(%arg0: i32, %arg1: i32) -> (i32, i32) {
    %c0_i32 = arith.constant 0 : i32
    %c0_i32_0 = arith.constant 0 : i32
    return %arg1, %c0_i32 : i32, i32
  }
  func.func @transform_4(%arg0: i32, %arg1: i32) -> (i32, i32) {
    %c0_i32 = arith.constant 0 : i32
    %c0_i32_0 = arith.constant 0 : i32
    %c0_i32_1 = arith.constant 0 : i32
    return %c0_i32, %c0_i32_0 : i32, i32
  }
  func.func @transform_5(%arg0: i32, %arg1: i32) -> (i32, i32) {
    %c0_i32 = arith.constant 0 : i32
    %c0_i32_0 = arith.constant 0 : i32
    return %arg0, %c0_i32 : i32, i32
  }
}

</mosaic_0001>

<llo_original>
// kernel: positionwise_ffn.1
$region0: #{positionwise_ffn.1}
  #allocation0 [shape = 'u32[]', space=smem, size = 0x4, offset = 0x4, fixed_abs, tag = 'smem constant byte address 0x4 - core index']
  #allocation1 [shape = 'u32[144,128]{1,0:T(1,128)}', space=vmem, size = 0x12000, scoped, tag = 'internal scratch']
  #allocation2 [shape = 'f32[16,32]{1,0:T(8,128)}', space=vmem, size = 0x2000, scoped, tag = 'scratch operand']
  %s0 = inlined_call_operand.vmem [shape: f32[16,32], index: 0, kind: input, shape index: {}]
  %s1 = inlined_call_operand.vmem [shape: f32[32,64], index: 1, kind: input, shape index: {}]
  %s2 = inlined_call_operand.vmem [shape: f32[1,64], index: 2, kind: input, shape index: {}]
  %s3 = inlined_call_operand.vmem [shape: f32[64,32], index: 3, kind: input, shape index: {}]
  %s4 = inlined_call_operand.vmem [shape: f32[1,32], index: 4, kind: input, shape index: {}]
  %s5 = inlined_call_operand.hbm [shape: f32[16,32], index: 5, kind: output, shape index: {}]
  %s6 = sld [smem:[#allocation0]]
  $region38: #{positionwise_ffn.1} parent=0
    _
  %s8 = ssub.s32 1, %s6
  %s9 = scalar_select 0, %s8, %s6
  $region1: #{positionwise_ffn.1} parent=0
    #allocation3 [shape = 'u8[8192]{0}', space=vmem, size = 0x2000, scoped, tag = 'output window, operand 0, single buffered']
    #allocation4 [shape = 's32[1]{0}', space=sflag, size = 0x4, scoped, tag = 'scoped memory for positionwise_ffn.1']
    %10 = vsyncpa [#allocation4], 0
    // Predicated region
    $region2: #{positionwise_ffn.1} parent=1 // pred_check
      _
    $region3: #{positionwise_ffn.1} parent=1 // pred_check_branch
      %12 = sbr.rel (0) target = $region5
    $region4: #{positionwise_ffn.1} parent=1 // pred_region
      _
    $region5: #{positionwise_ffn.1} parent=1 // pred_fallthru
      _
    // Predicated region
    $region6: #{positionwise_ffn.1} parent=1 // pred_check
      _
    $region7: #{positionwise_ffn.1} parent=1 // pred_check_branch
      %14 = sbr.rel (0) target = $region9
    $region8: #{positionwise_ffn.1} parent=1 // pred_region
      _
    $region9: #{positionwise_ffn.1} parent=1 // pred_fallthru
      _
    // Predicated region
    $region10: #{positionwise_ffn.1} parent=1 // pred_check
      _
    $region11: #{positionwise_ffn.1} parent=1 // pred_check_branch
      %16 = sbr.rel (0) target = $region13
    $region12: #{positionwise_ffn.1} parent=1 // pred_region
      _
    $region13: #{positionwise_ffn.1} parent=1 // pred_fallthru
      _
    // Predicated region
    $region14: #{positionwise_ffn.1} parent=1 // pred_check
      _
    $region15: #{positionwise_ffn.1} parent=1 // pred_check_branch
      %18 = sbr.rel (0) target = $region17
    $region16: #{positionwise_ffn.1} parent=1 // pred_region
      _
    $region17: #{positionwise_ffn.1} parent=1 // pred_fallthru
      _
    // Predicated region
    $region18: #{positionwise_ffn.1} parent=1 // pred_check
      _
    $region19: #{positionwise_ffn.1} parent=1 // pred_check_branch
      %20 = sbr.rel (0) target = $region21
    $region20: #{positionwise_ffn.1} parent=1 // pred_region
      _
    $region21: #{positionwise_ffn.1} parent=1 // pred_fallthru
      _
    %p21 = scmp.eq.s32.totalorder 0, 0
    // Predicated region
    $region22: #{positionwise_ffn.1} parent=1 // pred_check
      %p22 = pneg %p21
    $region23: #{positionwise_ffn.1} parent=1 // pred_check_branch
      %24 = sbr.rel (%p22) target = $region25
    $region24: #{positionwise_ffn.1} parent=1 // pred_region
      %vm25 = vcmask 261120
      %26 = vst.msk [vmem:[#allocation2] sm:$0xff] %vm25, 0.0
      %27 = vst.msk [vmem:[#allocation2 + $0x8] sm:$0xff] %vm25, 0.0
    $region25: #{positionwise_ffn.1} parent=1 // pred_fallthru
      _
    %v28 = vld [vmem:[%s0] sm:$0xff]
    %v29 = vld [vmem:[%s0 + $0x8] sm:$0xff]
    %v30 = vld [vmem:[%s1] sm:$0xff]
    %v31 = vld [vmem:[%s1 + $0x8] sm:$0xff]
    %v32 = vld [vmem:[%s1 + $0x10] sm:$0xff]
    %v33 = vld [vmem:[%s1 + $0x18] sm:$0xff]
    %v34 = vld [vmem:[%s2] sm:$0x1]
    %v36 = vlaneseq
    %v37 = vshrl.u32 %v36, 7
    %v38 = vsub.s32 0, %v37
    %v39 = vrot.slane %v34, %v38
    %vm41 = vcmask 261120
    %v43 = vsel %vm41, %v28, 0
    %v46 = vsel %vm41, %v29, 0
    %48 = vmatprep.subr.mxu0 0.0
    %49 = vmatpush1.msra.mxu0 %v30
    %50 = vmatprep.subr.mxu0 0.0
    %51 = vmatpush1.msra.mxu0 %v31
    %52 = vmatprep.subr.mxu0 0.0
    %53 = vmatpush1.msra.mxu0 %v32
    %54 = vmatprep.subr.mxu0 0.0
    %55 = vmatpush1.msra.mxu0 %v33
    %56 = vmatprep.subr.mxu0 0.0
    %57 = vmatpush1.msra.mxu0 0.0
    %58 = vmatprep.subr.mxu0 0.0
    %59 = vmatpush1.msra.mxu0 0.0
    %60 = vmatprep.subr.mxu0 0.0
    %61 = vmatpush1.msra.mxu0 0.0
    %62 = vmatprep.subr.mxu0 0.0
    %63 = vmatpush1.msra.mxu0 0.0
    %64 = vmatprep.subr.mxu0 0.0
    %65 = vmatpush1.msra.mxu0 0.0
    %66 = vmatprep.subr.mxu0 0.0
    %67 = vmatpush1.msra.mxu0 0.0
    %68 = vmatprep.subr.mxu0 0.0
    %69 = vmatpush1.msra.mxu0 0.0
    %70 = vmatprep.subr.mxu0 0.0
    %71 = vmatpush1.msra.mxu0 0.0
    %72 = vmatprep.subr.mxu0 0.0
    %73 = vmatpush1.msra.mxu0 0.0
    %74 = vmatprep.subr.mxu0 0.0
    %75 = vmatpush1.msra.mxu0 0.0
    %76 = vmatprep.subr.mxu0 0.0
    %77 = vmatpush1.msra.mxu0 0.0
    %78 = vmatprep.subr.mxu0 0.0
    %79 = vmatpush1.msra.mxu0 0.0
    %80 = vmatprep.subr.mxu0 0.0
    %81 = vmatpush1.msra.mxu0 0.0
    %82 = vmatprep.subr.mxu0 0.0
    %83 = vmatpush1.msra.mxu0 0.0
    %84 = vmatprep.subr.mxu0 0.0
    %85 = vmatpush1.msra.mxu0 0.0
    %86 = vmatprep.subr.mxu0 0.0
    %87 = vmatpush1.msra.mxu0 0.0
    %88 = vmatprep.subr.mxu0 0.0
    %89 = vmatpush1.msra.mxu0 0.0
    %90 = vmatprep.subr.mxu0 0.0
    %91 = vmatpush1.msra.mxu0 0.0
    %92 = vmatprep.subr.mxu0 0.0
    %93 = vmatpush1.msra.mxu0 0.0
    %94 = vmatprep.subr.mxu0 0.0
    %95 = vmatpush1.msra.mxu0 0.0
    %96 = vmatprep.subr.mxu0 0.0
    %97 = vmatpush1.msra.mxu0 0.0
    %98 = vmatprep.subr.mxu0 0.0
    %99 = vmatpush1.msra.mxu0 0.0
    %100 = vmatprep.subr.mxu0 0.0
    %101 = vmatpush1.msra.mxu0 0.0
    %102 = vmatprep.subr.mxu0 0.0
    %103 = vmatpush1.msra.mxu0 0.0
    %104 = vmatprep.subr.mxu0 0.0
    %105 = vmatpush1.msra.mxu0 0.0
    %106 = vmatprep.subr.mxu0 0.0
    %107 = vmatpush1.msra.mxu0 0.0
    %108 = vmatprep.subr.mxu0 0.0
    %109 = vmatpush1.msra.mxu0 0.0
    %110 = vmatprep.subr.mxu0 0.0
    %111 = vmatpush1.msra.mxu0 0.0
    %112 = vmatprep.mubr.f32.mxu0 0.0
    %113 = vmatmul.mubr.f32.gmra.mrb[0].mxu0 %v43
    %v114 = vpop.f32.mrb[0].mxu0
    %v115 = vadd.f32 %v39, %v114
    %v116 = vpop.f32.mrb[0].mxu0
    %117 = vmatprep.mubr.f32.mxu0 0.0
    %118 = vmatmul.mubr.f32.gmra.mrb[0].mxu0 %v46
    %v119 = vpop.f32.mrb[0].mxu0
    %v120 = vadd.f32 %v39, %v119
    %v121 = vpop.f32.mrb[0].mxu0
    %122 = vdwg.mxu0
    %v123 = vmax.f32 %v115, 0.0
    %v124 = vmax.f32 %v120, 0.0
    %v125 = vld [vmem:[#allocation2] sm:$0xff]
    %v126 = vld [vmem:[#allocation2 + $0x8] sm:$0xff]
    %v127 = vld [vmem:[%s3] sm:$0xff]
    %v128 = vld [vmem:[%s3 + $0x8] sm:$0xff]
    %v129 = vld [vmem:[%s3 + $0x10] sm:$0xff]
    %v130 = vld [vmem:[%s3 + $0x18] sm:$0xff]
    %v131 = vld [vmem:[%s3 + $0x20] sm:$0xff]
    %v132 = vld [vmem:[%s3 + $0x28] sm:$0xff]
    %v133 = vld [vmem:[%s3 + $0x30] sm:$0xff]
    %v134 = vld [vmem:[%s3 + $0x38] sm:$0xff]
    %vm135 = vcmask 523264
    %v137 = vsel %vm135, %v123, 0
    %v140 = vsel %vm135, %v124, 0
    %142 = vmatprep.subr.mxu0 0.0
    %143 = vmatpush1.msra.mxu0 %v127
    %144 = vmatprep.subr.mxu0 0.0
    %145 = vmatpush1.msra.mxu0 %v128
    %146 = vmatprep.subr.mxu0 0.0
    %147 = vmatpush1.msra.mxu0 %v129
    %148 = vmatprep.subr.mxu0 0.0
    %149 = vmatpush1.msra.mxu0 %v130
    %150 = vmatprep.subr.mxu0 0.0
    %151 = vmatpush1.msra.mxu0 %v131
    %152 = vmatprep.subr.mxu0 0.0
    %153 = vmatpush1.msra.mxu0 %v132
    %154 = vmatprep.subr.mxu0 0.0
    %155 = vmatpush1.msra.mxu0 %v133
    %156 = vmatprep.subr.mxu0 0.0
    %157 = vmatpush1.msra.mxu0 %v134
    %158 = vmatprep.subr.mxu0 0.0
    %159 = vmatpush1.msra.mxu0 0.0
    %160 = vmatprep.subr.mxu0 0.0
    %161 = vmatpush1.msra.mxu0 0.0
    %162 = vmatprep.subr.mxu0 0.0
    %163 = vmatpush1.msra.mxu0 0.0
    %164 = vmatprep.subr.mxu0 0.0
    %165 = vmatpush1.msra.mxu0 0.0
    %166 = vmatprep.subr.mxu0 0.0
    %167 = vmatpush1.msra.mxu0 0.0
    %168 = vmatprep.subr.mxu0 0.0
    %169 = vmatpush1.msra.mxu0 0.0
    %170 = vmatprep.subr.mxu0 0.0
    %171 = vmatpush1.msra.mxu0 0.0
    %172 = vmatprep.subr.mxu0 0.0
    %173 = vmatpush1.msra.mxu0 0.0
    %174 = vmatprep.subr.mxu0 0.0
    %175 = vmatpush1.msra.mxu0 0.0
    %176 = vmatprep.subr.mxu0 0.0
    %177 = vmatpush1.msra.mxu0 0.0
    %178 = vmatprep.subr.mxu0 0.0
    %179 = vmatpush1.msra.mxu0 0.0
    %180 = vmatprep.subr.mxu0 0.0
    %181 = vmatpush1.msra.mxu0 0.0
    %182 = vmatprep.subr.mxu0 0.0
    %183 = vmatpush1.msra.mxu0 0.0
    %184 = vmatprep.subr.mxu0 0.0
    %185 = vmatpush1.msra.mxu0 0.0
    %186 = vmatprep.subr.mxu0 0.0
    %187 = vmatpush1.msra.mxu0 0.0
    %188 = vmatprep.subr.mxu0 0.0
    %189 = vmatpush1.msra.mxu0 0.0
    %190 = vmatprep.subr.mxu0 0.0
    %191 = vmatpush1.msra.mxu0 0.0
    %192 = vmatprep.subr.mxu0 0.0
    %193 = vmatpush1.msra.mxu0 0.0
    %194 = vmatprep.subr.mxu0 0.0
    %195 = vmatpush1.msra.mxu0 0.0
    %196 = vmatprep.subr.mxu0 0.0
    %197 = vmatpush1.msra.mxu0 0.0
    %198 = vmatprep.subr.mxu0 0.0
    %199 = vmatpush1.msra.mxu0 0.0
    %200 = vmatprep.subr.mxu0 0.0
    %201 = vmatpush1.msra.mxu0 0.0
    %202 = vmatprep.subr.mxu0 0.0
    %203 = vmatpush1.msra.mxu0 0.0
    %204 = vmatprep.subr.mxu0 0.0
    %205 = vmatpush1.msra.mxu0 0.0
    %206 = vmatprep.mubr.f32.mxu0 0.0
    %207 = vmatmul.mubr.f32.gmra.mrb[0].mxu0 %v137
    %v208 = vpop.f32.mrb[0].mxu0
    %v209 = vadd.f32 0.0, %v208
    %v210 = vpop.f32.mrb[0].mxu0
    %211 = vmatprep.mubr.f32.mxu0 0.0
    %212 = vmatmul.mubr.f32.gmra.mrb[0].mxu0 %v140
    %v213 = vpop.f32.mrb[0].mxu0
    %v214 = vadd.f32 0.0, %v213
    %v215 = vpop.f32.mrb[0].mxu0
    %216 = vdwg.mxu0
    %v217 = vadd.f32 %v125, %v209
    %v218 = vadd.f32 %v126, %v214
    %219 = vst.msk [vmem:[#allocation2] sm:$0xff] %vm41, %v217
    %220 = vst.msk [vmem:[#allocation2 + $0x8] sm:$0xff] %vm41, %v218
    // Predicated region
    $region26: #{positionwise_ffn.1} parent=1 // pred_check
      %p221 = pneg %p21
    $region27: #{positionwise_ffn.1} parent=1 // pred_check_branch
      %223 = sbr.rel (%p221) target = $region29
    $region28: #{positionwise_ffn.1} parent=1 // pred_region
      %v224 = vld [vmem:[#allocation2] sm:$0xff]
      %v225 = vld [vmem:[#allocation2 + $0x8] sm:$0xff]
      %v226 = vld [vmem:[%s4] sm:$0x1]
      %v228 = vlaneseq
      %v229 = vshrl.u32 %v228, 7
      %v230 = vsub.s32 0, %v229
      %v231 = vrot.slane %v226, %v230
      %v233 = vadd.f32 %v224, %v231
      %v234 = vadd.f32 %v225, %v231
      %235 = vst.msk [vmem:[#allocation3] sm:$0xff] %vm41, %v233
      %236 = vst.msk [vmem:[#allocation3 + $0x8] sm:$0xff] %vm41, %v234
    $region29: #{positionwise_ffn.1} parent=1 // pred_fallthru
      _
    // Predicated region
    $region30: #{positionwise_ffn.1} parent=1 // pred_check
      _
    $region31: #{positionwise_ffn.1} parent=1 // pred_check_branch
      %238 = sbr.rel (0) target = $region33
    $region32: #{positionwise_ffn.1} parent=1 // pred_region
      %s240 = ssub.s32 256, 256
      %241 = vsyncadd [#allocation4], %s240
      %s242 = sshll.u32 [#allocation3], 4
      %s243 = int_to_ptr.vmem [resolvable:$true] %s242
      %248 = dma.vmem_to_hbm [thread:$0]  %s243, 256, %s5, [#allocation4], 128, 128, 8
    $region33: #{positionwise_ffn.1} parent=1 // pred_fallthru
      _
    // Predicated region
    $region34: #{positionwise_ffn.1} parent=1 // pred_check
      _
    $region35: #{positionwise_ffn.1} parent=1 // pred_check_branch
      %250 = sbr.rel (0) target = $region37
    $region36: #{positionwise_ffn.1} parent=1 // pred_region
      %251 = dma.done [#allocation4], 256
    $region37: #{positionwise_ffn.1} parent=1 // pred_fallthru
      _
    %252 = vsyncpa [#allocation4], 1

</llo_original>
